<compile_context>
chip_gen: v5e
topology: v5e:2x2
jax: 0.10.0
libtpu: 0.0.40
codegen_flags: <defaults>
</compile_context>

<pallas_src>
import math

import jax
import jax.numpy as jnp
from jax import lax
from jax.experimental import pallas as pl
from jax.experimental.pallas import tpu as pltpu


_SQRT_HALF = 0.7071067811865476


def _erf_approx(z):
    """Abramowitz & Stegun 7.1.26 rational erf approximation (|err| < 1.5e-7).

    Only mul/add/abs/select on the VPU; the divide is an EUP approximate
    reciprocal and the exp is an EUP transcendental, so both ride an
    otherwise-idle issue slot instead of the VALU.
    """
    p = 0.3275911
    a1, a2, a3, a4, a5 = 0.254829592, -0.284496736, 1.421413741, -1.453152027, 1.061405429
    az = jnp.abs(z)
    t = pl.reciprocal(1.0 + p * az, approx=True)           # EUP slot, ~free
    poly = ((((a5 * t + a4) * t + a3) * t + a2) * t + a1) * t
    e = 1.0 - poly * jnp.exp(-(z * z))                      # EUP exp
    return jnp.where(z < 0, -e, e)


def _gelu_exact(h):
    """Exact (erf-based) GELU, matching torch's default nn.GELU()."""
    return 0.5 * h * (1.0 + _erf_approx(h * _SQRT_HALF))


def _make_mlp_kernel(chunks, mxu_dtype):
    """Fused fc1 + GELU + fc2 over static hidden-dimension slabs."""

    def kernel(x_ref, w1_ref, b1_ref, w2_ref, b2_ref, o_ref):
        x = x_ref[...].astype(mxu_dtype)                     # (tm, Din) MXU operand
        acc = None
        for (s, c) in chunks:                                # static, unrolled
            h = jnp.dot(x, w1_ref[:, s:s + c],
                        preferred_element_type=jnp.float32)  # (tm, c) f32 accum
            h = h + b1_ref[:, s:s + c]                       # f32 bias
            h = _gelu_exact(h)                               # f32 elementwise
            # nn.Dropout(p=0.0) is the identity -> nothing to do.
            # TODO(synk): stochastic dropout (p > 0) not implemented; module default is 0.0.
            part = jnp.dot(h.astype(mxu_dtype), w2_ref[s:s + c, :],
                           preferred_element_type=jnp.float32)   # (tm, Dout) f32
            acc = part if acc is None else acc + part
        y = acc + b2_ref[...]
        o_ref[...] = y.astype(o_ref.dtype)

    return kernel


def _round_up(x, m):
    return (x + m - 1) // m * m


def _hidden_chunks(hidden, cap):
    bounds, s = [], 0
    while s < hidden:
        c = min(cap, hidden - s)
        bounds.append((s, c))
        s += c
    return tuple(bounds)


def _vmem_budget():
    """(physical VMEM bytes, usable budget) — generation aware."""
    try:
        info = pltpu.get_tpu_info()
        cap = int(getattr(info, "vmem_capacity_bytes", None)
                  or getattr(info, "vmem_size_bytes"))
    except Exception:
        cap = 64 * 2 ** 20                 # conservative (v7x-sized) fallback
    headroom = max(12 * 2 ** 20, cap // 6)  # Mosaic internal scratch etc.
    return cap, cap - headroom              # v5e/v6e: ~107 MiB, v7x: ~52 MiB


def _pick_tm(din, hidden, dout, chunk, x_itemsize, out_itemsize, mxu_itemsize, budget):
    """Largest row tile whose estimated VMEM footprint fits the budget."""
    # Resident weights/biases: constant index_map -> pipeline keeps 2 buffers,
    # so they are counted double-buffered, at the MXU (weight) dtype.
    fixed = 2 * (din * hidden + hidden * dout) * mxu_itemsize + 2 * (hidden + dout) * 4
    per_row = (2 * din * x_itemsize            # double-buffered x tiles
               + 2 * dout * out_itemsize       # double-buffered output tiles
               + din * mxu_itemsize            # x cast to MXU dtype
               + chunk * (4 + mxu_itemsize)    # f32 hidden slab + its MXU-dtype copy
               + dout * 4)                     # f32 fc2 accumulator
    for tm in (1024, 768, 512, 384, 256, 128, 64, 32, 16, 8):
        need = fixed + tm * per_row
        if need <= budget:
            return tm, need
    return 8, fixed + 8 * per_row


def mlp_forward(x, w1, b1, w2, b2, *, mxu_dtype=None, hidden_chunk=512):
    """Fused MLP forward.

    x:  (..., in_features)   any leading dims (e.g. (B, H, W, C) for VMamba).
    w1: (in_features, hidden_features)   -- PyTorch fc1.weight transposed ONCE at load time
    b1: (hidden_features,)
    w2: (hidden_features, out_features)  -- PyTorch fc2.weight transposed ONCE at load time
    b2: (out_features,)
    Returns (..., out_features) in x.dtype.
    """
    orig_shape = x.shape
    din = orig_shape[-1]
    hidden = w1.shape[1]
    dout = w2.shape[1]

    if mxu_dtype is None:
        # bf16 MXU operands (with f32 accumulation) are ~3x faster than
        # multi-pass f32 matmuls and halve resident weight VMEM.
        mxu_dtype = jnp.bfloat16 if x.dtype in (jnp.float32, jnp.bfloat16) else x.dtype
    mxu_dtype = jnp.dtype(mxu_dtype)

    # One-time layout/dtype prep (in a real model do this at parameter load).
    w1 = w1.astype(mxu_dtype)
    w2 = w2.astype(mxu_dtype)
    b1 = b1.astype(jnp.float32).reshape(1, hidden)
    b2 = b2.astype(jnp.float32).reshape(1, dout)

    x_rows = x.reshape(-1, din)
    m = x_rows.shape[0]

    chunks = _hidden_chunks(hidden, hidden_chunk)
    chunk = max(c for _, c in chunks)

    vmem_cap, vmem_budget = _vmem_budget()
    tm, vmem_needed = _pick_tm(din, hidden, dout, chunk,
                               x.dtype.itemsize, x.dtype.itemsize,
                               mxu_dtype.itemsize, vmem_budget)

    if m < 8:
        tm = m                                       # block == full dim (allowed)
    else:
        tm = min(tm, _round_up(m, 8))
        if m >= 64:
            # Ensure >= 2 grid steps so ("parallel",) shards rows over both
            # v7x TensorCores (no effect on single-TC v5e/v6e).
            tm = min(tm, _round_up(pl.cdiv(m, 2), 8))
    grid = (pl.cdiv(m, tm),)

    vmem_limit = int(min(vmem_cap, max(vmem_needed * 5 // 4 + (2 << 20), 32 << 20)))

    kernel = _make_mlp_kernel(chunks, mxu_dtype)

    out = pl.pallas_call(
        kernel,
        out_shape=jax.ShapeDtypeStruct((m, dout), x.dtype),
        grid_spec=pltpu.PrefetchScalarGridSpec(
            num_scalar_prefetch=0,
            grid=grid,
            in_specs=[
                pl.BlockSpec((tm, din), lambda i: (i, 0)),
                pl.BlockSpec((din, hidden), lambda i: (0, 0)),   # resident weight
                pl.BlockSpec((1, hidden), lambda i: (0, 0)),     # resident bias
                pl.BlockSpec((hidden, dout), lambda i: (0, 0)),  # resident weight
                pl.BlockSpec((1, dout), lambda i: (0, 0)),       # resident bias
            ],
            out_specs=pl.BlockSpec((tm, dout), lambda i: (i, 0)),
        ),
        compiler_params=pltpu.CompilerParams(
            dimension_semantics=("parallel",),
            vmem_limit_bytes=vmem_limit,
        ),
    )(x_rows, w1, b1, w2, b2)

    return out.reshape(orig_shape[:-1] + (dout,))


def _reference_exact(x, w1, b1, w2, b2):
    """Pure-JAX f32 reference (exact erf GELU, HIGHEST-precision matmuls)."""
    xf = x.astype(jnp.float32)
    h = jnp.einsum("...c,ch->...h", xf, w1.astype(jnp.float32),
                   precision=lax.Precision.HIGHEST) + b1.astype(jnp.float32)
    h = 0.5 * h * (1.0 + jax.scipy.special.erf(h * _SQRT_HALF))
    y = jnp.einsum("...h,ho->...o", h, w2.astype(jnp.float32),
                   precision=lax.Precision.HIGHEST) + b2.astype(jnp.float32)
    return y


def _reference_matched(x, w1, b1, w2, b2, mxu_dtype):
    """Reference with the kernel's numerics policy: MXU-dtype operands,
    f32 accumulation, exact erf GELU in f32."""
    din = x.shape[-1]
    h = jnp.dot(x.reshape(-1, din).astype(mxu_dtype), w1.astype(mxu_dtype),
                preferred_element_type=jnp.float32) + b1.astype(jnp.float32)
    h = 0.5 * h * (1.0 + jax.scipy.special.erf(h * _SQRT_HALF))
    y = jnp.dot(h.astype(mxu_dtype), w2.astype(mxu_dtype),
                preferred_element_type=jnp.float32) + b2.astype(jnp.float32)
    return y.reshape(x.shape[:-1] + (w2.shape[1],))


if __name__ == "__main__":
    # Small but TPU-friendly shapes: lane-dense in/out (multiples of 128).
    B, Hsp, Wsp = 2, 8, 8
    in_features, hidden_features, out_features = 128, 256, 128

    key = jax.random.PRNGKey(0)
    k_x, k_w1, k_b1, k_w2, k_b2 = jax.random.split(key, 5)

    x = jax.random.normal(k_x, (B, Hsp, Wsp, in_features), dtype=jnp.float32)

    # Parameters in PyTorch Linear layout (out, in), ~default init scale.
    w1_pt = jax.random.normal(k_w1, (hidden_features, in_features), jnp.float32) / math.sqrt(in_features)
    b1 = 0.1 * jax.random.normal(k_b1, (hidden_features,), jnp.float32)
    w2_pt = jax.random.normal(k_w2, (out_features, hidden_features), jnp.float32) / math.sqrt(hidden_features)
    b2 = 0.1 * jax.random.normal(k_b2, (out_features,), jnp.float32)

    # One-time layout prep (done at parameter-load time, not per call).
    w1 = jnp.transpose(w1_pt)   # (in, hidden)
    w2 = jnp.transpose(w2_pt)   # (hidden, out)

    out = mlp_forward(x, w1, b1, w2, b2)
    out = jax.block_until_ready(out)
    assert out.shape == (B, Hsp, Wsp, out_features), out.shape
    assert out.dtype == x.dtype
    out_f32 = out.astype(jnp.float32)

    # Tight check vs. a reference that uses the kernel's own numerics policy
    # (bf16 MXU operands, f32 accumulation, exact erf GELU).
    ref_m = _reference_matched(x, w1, b1, w2, b2, jnp.bfloat16)
    err_m = float(jnp.max(jnp.abs(out_f32 - ref_m)))
    assert jnp.allclose(out_f32, ref_m, atol=1e-2, rtol=1e-2), f"matched-ref mismatch: {err_m}"

    # Looser check vs. the exact f32 reference (bf16 MXU-operand rounding dominates).
    ref_x = _reference_exact(x, w1, b1, w2, b2)
    err_x = float(jnp.max(jnp.abs(out_f32 - ref_x)))
    assert jnp.allclose(out_f32, ref_x, atol=3e-2, rtol=3e-2), f"exact-ref mismatch: {err_x}"

    print("KERNEL_OK")
</pallas_src>

<mosaic_0001>
module attributes {stable_mosaic.version = 11 : i64} {
  func.func @kernel(%arg0: i32, %arg1: memref<64x128xf32, #tpu.memory_space<vmem>>, %arg2: memref<128x256xbf16, #tpu.memory_space<vmem>>, %arg3: memref<1x256xf32, #tpu.memory_space<vmem>>, %arg4: memref<256x128xbf16, #tpu.memory_space<vmem>>, %arg5: memref<1x128xf32, #tpu.memory_space<vmem>>, %arg6: memref<64x128xf32, #tpu.memory_space<vmem>>) attributes {dimension_semantics = [#tpu.dimension_semantics<parallel>], iteration_bounds = array<i64: 2>, scalar_prefetch = 0 : i64, scratch_operands = 0 : i64, tpu.core_type = #tpu.core_type<tc>, window_params = [{transform_indices = @transform_0, window_bounds = array<i64: 64, 128>}, {pipeline_mode = #tpu.pipeline_mode<synchronous>, transform_indices = @transform_1, window_bounds = array<i64: 128, 256>}, {pipeline_mode = #tpu.pipeline_mode<synchronous>, transform_indices = @transform_2, window_bounds = array<i64: 1, 256>}, {pipeline_mode = #tpu.pipeline_mode<synchronous>, transform_indices = @transform_3, window_bounds = array<i64: 256, 128>}, {pipeline_mode = #tpu.pipeline_mode<synchronous>, transform_indices = @transform_4, window_bounds = array<i64: 1, 128>}, {transform_indices = @transform_5, window_bounds = array<i64: 64, 128>}]} {
    %c0 = arith.constant 0 : index
    %c0_0 = arith.constant 0 : index
    %0 = vector.load %arg1[%c0, %c0_0] : memref<64x128xf32, #tpu.memory_space<vmem>>, vector<64x128xf32>
    %1 = arith.truncf %0 : vector<64x128xf32> to vector<64x128xbf16>
    %c0_1 = arith.constant 0 : index
    %c0_2 = arith.constant 0 : index
    %2 = vector.load %arg2[%c0_1, %c0_2] : memref<128x256xbf16, #tpu.memory_space<vmem>>, vector<128x256xbf16>
    %cst = arith.constant dense<0.000000e+00> : vector<64x256xf32>
    %3 = tpu.matmul %1, %2, %cst {dimension_numbers = #tpu.dot_dimension_numbers<[1], [0], [0], [1], [0, 0, 1, 1], [], []>} : vector<64x128xbf16>, vector<128x256xbf16>, vector<64x256xf32> -> vector<64x256xf32>
    %c0_3 = arith.constant 0 : index
    %c0_4 = arith.constant 0 : index
    %4 = vector.load %arg3[%c0_3, %c0_4] : memref<1x256xf32, #tpu.memory_space<vmem>>, vector<1x256xf32>
    %5 = vector.broadcast %4 : vector<1x256xf32> to vector<64x256xf32>
    %6 = arith.addf %3, %5 : vector<64x256xf32>
    %cst_5 = arith.constant 5.000000e-01 : f32
    %7 = vector.broadcast %cst_5 : f32 to vector<64x256xf32>
    %8 = arith.mulf %7, %6 : vector<64x256xf32>
    %cst_6 = arith.constant 0.707106769 : f32
    %9 = vector.broadcast %cst_6 : f32 to vector<64x256xf32>
    %10 = arith.mulf %6, %9 : vector<64x256xf32>
    %11 = math.absf %10 : vector<64x256xf32>
    %cst_7 = arith.constant 0.327591091 : f32
    %12 = vector.broadcast %cst_7 : f32 to vector<64x256xf32>
    %13 = arith.mulf %12, %11 : vector<64x256xf32>
    %cst_8 = arith.constant 1.000000e+00 : f32
    %14 = vector.broadcast %cst_8 : f32 to vector<64x256xf32>
    %15 = arith.addf %14, %13 : vector<64x256xf32>
    %16 = tpu.reciprocal %15 {approx = true} : vector<64x256xf32> -> vector<64x256xf32>
    %cst_9 = arith.constant 1.06140542 : f32
    %17 = vector.broadcast %cst_9 : f32 to vector<64x256xf32>
    %18 = arith.mulf %17, %16 : vector<64x256xf32>
    %cst_10 = arith.constant -1.45315206 : f32
    %19 = vector.broadcast %cst_10 : f32 to vector<64x256xf32>
    %20 = arith.addf %18, %19 : vector<64x256xf32>
    %21 = arith.mulf %20, %16 : vector<64x256xf32>
    %cst_11 = arith.constant 1.42141378 : f32
    %22 = vector.broadcast %cst_11 : f32 to vector<64x256xf32>
    %23 = arith.addf %21, %22 : vector<64x256xf32>
    %24 = arith.mulf %23, %16 : vector<64x256xf32>
    %cst_12 = arith.constant -0.284496725 : f32
    %25 = vector.broadcast %cst_12 : f32 to vector<64x256xf32>
    %26 = arith.addf %24, %25 : vector<64x256xf32>
    %27 = arith.mulf %26, %16 : vector<64x256xf32>
    %cst_13 = arith.constant 0.254829586 : f32
    %28 = vector.broadcast %cst_13 : f32 to vector<64x256xf32>
    %29 = arith.addf %27, %28 : vector<64x256xf32>
    %30 = arith.mulf %29, %16 : vector<64x256xf32>
    %31 = arith.mulf %10, %10 : vector<64x256xf32>
    %cst_14 = arith.constant 0.000000e+00 : f32
    %32 = vector.broadcast %cst_14 : f32 to vector<64x256xf32>
    %33 = arith.subf %32, %31 : vector<64x256xf32>
    %34 = math.exp %33 : vector<64x256xf32>
    %35 = arith.mulf %30, %34 : vector<64x256xf32>
    %cst_15 = arith.constant 1.000000e+00 : f32
    %36 = vector.broadcast %cst_15 : f32 to vector<64x256xf32>
    %37 = arith.subf %36, %35 : vector<64x256xf32>
    %cst_16 = arith.constant 0.000000e+00 : f32
    %38 = vector.broadcast %cst_16 : f32 to vector<64x256xf32>
    %39 = arith.cmpf olt, %10, %38 : vector<64x256xf32>
    %cst_17 = arith.constant 0.000000e+00 : f32
    %40 = vector.broadcast %cst_17 : f32 to vector<64x256xf32>
    %41 = arith.subf %40, %37 : vector<64x256xf32>
    %42 = arith.select %39, %41, %37 : vector<64x256xi1>, vector<64x256xf32>
    %cst_18 = arith.constant 1.000000e+00 : f32
    %43 = vector.broadcast %cst_18 : f32 to vector<64x256xf32>
    %44 = arith.addf %43, %42 : vector<64x256xf32>
    %45 = arith.mulf %8, %44 : vector<64x256xf32>
    %46 = arith.truncf %45 : vector<64x256xf32> to vector<64x256xbf16>
    %c0_19 = arith.constant 0 : index
    %c0_20 = arith.constant 0 : index
    %47 = vector.load %arg4[%c0_19, %c0_20] : memref<256x128xbf16, #tpu.memory_space<vmem>>, vector<256x128xbf16>
    %cst_21 = arith.constant dense<0.000000e+00> : vector<64x128xf32>
    %48 = tpu.matmul %46, %47, %cst_21 {dimension_numbers = #tpu.dot_dimension_numbers<[1], [0], [0], [1], [0, 0, 1, 1], [], []>} : vector<64x256xbf16>, vector<256x128xbf16>, vector<64x128xf32> -> vector<64x128xf32>
    %c0_22 = arith.constant 0 : index
    %c0_23 = arith.constant 0 : index
    %49 = vector.load %arg5[%c0_22, %c0_23] : memref<1x128xf32, #tpu.memory_space<vmem>>, vector<1x128xf32>
    %50 = vector.broadcast %49 : vector<1x128xf32> to vector<64x128xf32>
    %51 = arith.addf %48, %50 : vector<64x128xf32>
    %c0_24 = arith.constant 0 : index
    %c0_25 = arith.constant 0 : index
    %52 = vector.load %arg6[%c0_24, %c0_25] : memref<64x128xf32, #tpu.memory_space<vmem>>, vector<64x128xf32>
    tpu.vector_store %arg6[%c0_24, %c0_25], %51 {strides = array<i32>} : memref<64x128xf32, #tpu.memory_space<vmem>>, vector<64x128xf32>,
    return
  }
  func.func @transform_0(%arg0: i32) -> (i32, i32) {
    %c0_i32 = arith.constant 0 : i32
    %c0_i32_0 = arith.constant 0 : i32
    return %arg0, %c0_i32 : i32, i32
  }
  func.func @transform_1(%arg0: i32) -> (i32, i32) {
    %c0_i32 = arith.constant 0 : i32
    %c0_i32_0 = arith.constant 0 : i32
    %c0_i32_1 = arith.constant 0 : i32
    return %c0_i32, %c0_i32_0 : i32, i32
  }
  func.func @transform_2(%arg0: i32) -> (i32, i32) {
    %c0_i32 = arith.constant 0 : i32
    %c0_i32_0 = arith.constant 0 : i32
    %c0_i32_1 = arith.constant 0 : i32
    return %c0_i32, %c0_i32_0 : i32, i32
  }
  func.func @transform_3(%arg0: i32) -> (i32, i32) {
    %c0_i32 = arith.constant 0 : i32
    %c0_i32_0 = arith.constant 0 : i32
    %c0_i32_1 = arith.constant 0 : i32
    return %c0_i32, %c0_i32_0 : i32, i32
  }
  func.func @transform_4(%arg0: i32) -> (i32, i32) {
    %c0_i32 = arith.constant 0 : i32
    %c0_i32_0 = arith.constant 0 : i32
    %c0_i32_1 = arith.constant 0 : i32
    return %c0_i32, %c0_i32_0 : i32, i32
  }
  func.func @transform_5(%arg0: i32) -> (i32, i32) {
    %c0_i32 = arith.constant 0 : i32
    %c0_i32_0 = arith.constant 0 : i32
    return %arg0, %c0_i32 : i32, i32
  }
}

</mosaic_0001>

<llo_original>
// kernel: tpu_custom_call.1
$region0: #{tpu_custom_call.1}
  #allocation0 [shape = 'u32[]', space=smem, size = 0x4, offset = 0x4, fixed_abs, tag = 'smem constant byte address 0x4 - core index']
  #allocation1 [shape = 'u32[72,128]{1,0:T(1,128)}', space=vmem, size = 0x9000, scoped, tag = 'internal scratch']
  %s0 = inlined_call_operand.hbm [shape: f32[128,128], index: 0, kind: input, shape index: {}]
  %s1 = inlined_call_operand.hbm [shape: bf16[128,256], index: 1, kind: input, shape index: {}]
  %s2 = inlined_call_operand.hbm [shape: f32[1,256], index: 2, kind: input, shape index: {}]
  %s3 = inlined_call_operand.hbm [shape: bf16[256,128], index: 3, kind: input, shape index: {}]
  %s4 = inlined_call_operand.vmem [shape: f32[1,128], index: 4, kind: input, shape index: {}]
  %s5 = inlined_call_operand.hbm [shape: f32[128,128], index: 5, kind: output, shape index: {}]
  %s6 = sld [smem:[#allocation0]]
  $region69: #{tpu_custom_call.1} parent=0
    _
  %s8 = ssub.s32 1, %s6
  %s9 = scalar_select 0, %s8, %s6
  $region1: #{tpu_custom_call.1} parent=0
    #allocation2 [shape = 'u8[65536]{0}', space=vmem, size = 0x10000, scoped, tag = 'input window, operand 0']
    #allocation3 [shape = 's32[2]{0}', space=sflag, size = 0x8, scoped, tag = 'scoped memory for tpu_custom_call.1']
    #allocation4 [shape = 's32[2]{0}', space=sflag, size = 0x8, scoped, tag = 'scoped memory for tpu_custom_call.1']
    #allocation5 [shape = 'u8[65536]{0}', space=vmem, size = 0x10000, scoped, tag = 'input window, operand 1, single buffered']
    #allocation6 [shape = 's32[1]{0}', space=sflag, size = 0x4, scoped, tag = 'scoped memory for tpu_custom_call.1']
    #allocation7 [shape = 'u8[1024]{0}', space=vmem, size = 0x400, scoped, tag = 'input window, operand 2, single buffered']
    #allocation8 [shape = 'u8[65536]{0}', space=vmem, size = 0x10000, scoped, tag = 'input window, operand 3, single buffered']
    #allocation9 [shape = 's32[1]{0}', space=sflag, size = 0x4, scoped, tag = 'scoped memory for tpu_custom_call.1']
    #allocation10 [shape = 'u8[65536]{0}', space=vmem, size = 0x10000, scoped, tag = 'output window, operand 0']
    %10 = vsyncpa [#allocation3], 0
    %s11 = scalar_lea.sflag [#allocation3], 1
    %12 = vsyncpa %s11, 0
    %13 = vsyncpa [#allocation6], 0
    %14 = vsyncpa [#allocation9], 0
    %15 = vsyncpa [#allocation4], 0
    %s16 = scalar_lea.sflag [#allocation4], 1
    %17 = vsyncpa %s16, 0
    loop: start=0, step=1, limit=4
    $region2: #{tpu_custom_call.1} parent=1 // loop_pre_header
      _
    $region3: #{tpu_custom_call.1} parent=1 // loop_header
      %s19 = sphi 0, %s23
      %p20 = scmp.ge.s32.totalorder %s19, 4
      %s29 = sphi 0, %s31
      %s32 = sphi 0, %s29
      %s33 = sphi 0, %s32
      %s49 = sphi 0, %s33
      %s53 = sphi 0, %s53
      %s55 = sphi 0, %s53
      %s56 = sphi 0, %s55
      %s70 = sphi 0, %s56
      %s74 = sphi 0, %s74
      %s76 = sphi 0, %s74
      %s77 = sphi 0, %s76
      %s91 = sphi 0, %s77
      %s95 = sphi 0, %s95
      %s97 = sphi 0, %s95
      %s98 = sphi 0, %s97
      %s112 = sphi 0, %s98
      %s116 = sphi 0, %s116
      %s118 = sphi 0, %s116
      %s119 = sphi 0, %s118
      %s133 = sphi 0, %s119
      %s139 = sphi 0, %s141
      %s142 = sphi 0, %s139
      %s143 = sphi 0, %s142
      %s159 = sphi 0, %s143
    $region4: #{tpu_custom_call.1} parent=1 // loop_header_branch
      %22 = sbr.rel (%p20) target = $region8
    $region5: #{tpu_custom_call.1} parent=1 // loop_body
      %s24 = ssub.s32 %s19, 1
      %s25 = ssub.s32 %s19, 2
      %s26 = sadd.s32 %s19, 1
      %s27 = ssub.s32 %s19, %s26
      %p28 = scmp.eq.s32.totalorder %s27, 0
      %s30 = sadd.s32 %s29, 1
      %s31 = scalar_select %p28, %s29, %s30
      %p34 = pneg %p28
      %p35 = scmp.eq.s32.totalorder %s19, 1
      %p36 = por %p34, %p35
      %p37 = scmp.ne.s32.totalorder %s29, %s32
      %p38 = scmp.eq.s32.totalorder %s19, 0
      %p39 = por %p37, %p38
      %p40 = scmp.ne.s32.totalorder %s29, %s32
      %p41 = scmp.eq.s32.totalorder %s24, 1
      %p42 = por %p40, %p41
      %p43 = scmp.ne.s32.totalorder %s32, %s33
      %p44 = scmp.eq.s32.totalorder %s24, 0
      %p45 = por %p43, %p44
      %p46 = scmp.ne.s32.totalorder %s32, %s33
      %p47 = scmp.eq.s32.totalorder %s25, 1
      %p48 = por %p46, %p47
      %p50 = scmp.ne.s32.totalorder %s33, %s49
      %p51 = scmp.eq.s32.totalorder %s25, 0
      %p52 = por %p50, %p51
      %s54 = sadd.s32 %s53, 1
      %p57 = scmp.eq.s32.totalorder %s19, 1
      %p58 = scmp.ne.s32.totalorder %s53, %s55
      %p59 = scmp.eq.s32.totalorder %s19, 0
      %p60 = por %p58, %p59
      %p61 = scmp.ne.s32.totalorder %s53, %s55
      %p62 = scmp.eq.s32.totalorder %s24, 1
      %p63 = por %p61, %p62
      %p64 = scmp.ne.s32.totalorder %s55, %s56
      %p65 = scmp.eq.s32.totalorder %s24, 0
      %p66 = por %p64, %p65
      %p67 = scmp.ne.s32.totalorder %s55, %s56
      %p68 = scmp.eq.s32.totalorder %s25, 1
      %p69 = por %p67, %p68
      %p71 = scmp.ne.s32.totalorder %s56, %s70
      %p72 = scmp.eq.s32.totalorder %s25, 0
      %p73 = por %p71, %p72
      %s75 = sadd.s32 %s74, 1
      %p78 = scmp.eq.s32.totalorder %s19, 1
      %p79 = scmp.ne.s32.totalorder %s74, %s76
      %p80 = scmp.eq.s32.totalorder %s19, 0
      %p81 = por %p79, %p80
      %p82 = scmp.ne.s32.totalorder %s74, %s76
      %p83 = scmp.eq.s32.totalorder %s24, 1
      %p84 = por %p82, %p83
      %p85 = scmp.ne.s32.totalorder %s76, %s77
      %p86 = scmp.eq.s32.totalorder %s24, 0
      %p87 = por %p85, %p86
      %p88 = scmp.ne.s32.totalorder %s76, %s77
      %p89 = scmp.eq.s32.totalorder %s25, 1
      %p90 = por %p88, %p89
      %p92 = scmp.ne.s32.totalorder %s77, %s91
      %p93 = scmp.eq.s32.totalorder %s25, 0
      %p94 = por %p92, %p93
      %s96 = sadd.s32 %s95, 1
      %p99 = scmp.eq.s32.totalorder %s19, 1
      %p100 = scmp.ne.s32.totalorder %s95, %s97
      %p101 = scmp.eq.s32.totalorder %s19, 0
      %p102 = por %p100, %p101
      %p103 = scmp.ne.s32.totalorder %s95, %s97
      %p104 = scmp.eq.s32.totalorder %s24, 1
      %p105 = por %p103, %p104
      %p106 = scmp.ne.s32.totalorder %s97, %s98
      %p107 = scmp.eq.s32.totalorder %s24, 0
      %p108 = por %p106, %p107
      %p109 = scmp.ne.s32.totalorder %s97, %s98
      %p110 = scmp.eq.s32.totalorder %s25, 1
      %p111 = por %p109, %p110
      %p113 = scmp.ne.s32.totalorder %s98, %s112
      %p114 = scmp.eq.s32.totalorder %s25, 0
      %p115 = por %p113, %p114
      %s117 = sadd.s32 %s116, 1
      %p120 = scmp.eq.s32.totalorder %s19, 1
      %p121 = scmp.ne.s32.totalorder %s116, %s118
      %p122 = scmp.eq.s32.totalorder %s19, 0
      %p123 = por %p121, %p122
      %p124 = scmp.ne.s32.totalorder %s116, %s118
      %p125 = scmp.eq.s32.totalorder %s24, 1
      %p126 = por %p124, %p125
      %p127 = scmp.ne.s32.totalorder %s118, %s119
      %p128 = scmp.eq.s32.totalorder %s24, 0
      %p129 = por %p127, %p128
      %p130 = scmp.ne.s32.totalorder %s118, %s119
      %p131 = scmp.eq.s32.totalorder %s25, 1
      %p132 = por %p130, %p131
      %p134 = scmp.ne.s32.totalorder %s119, %s133
      %p135 = scmp.eq.s32.totalorder %s25, 0
      %p136 = por %p134, %p135
      %s137 = ssub.s32 %s19, %s26
      %p138 = scmp.eq.s32.totalorder %s137, 0
      %s140 = sadd.s32 %s139, 1
      %s141 = scalar_select %p138, %s139, %s140
      %p144 = pneg %p138
      %p145 = scmp.eq.s32.totalorder %s19, 1
      %p146 = por %p144, %p145
      %p147 = scmp.ne.s32.totalorder %s139, %s142
      %p148 = scmp.eq.s32.totalorder %s19, 0
      %p149 = por %p147, %p148
      %p150 = scmp.ne.s32.totalorder %s139, %s142
      %p151 = scmp.eq.s32.totalorder %s24, 1
      %p152 = por %p150, %p151
      %p153 = scmp.ne.s32.totalorder %s142, %s143
      %p154 = scmp.eq.s32.totalorder %s24, 0
      %p155 = por %p153, %p154
      %p156 = scmp.ne.s32.totalorder %s142, %s143
      %p157 = scmp.eq.s32.totalorder %s25, 1
      %p158 = por %p156, %p157
      %p160 = scmp.ne.s32.totalorder %s143, %s159
      %p161 = scmp.eq.s32.totalorder %s25, 0
      %p162 = por %p160, %p161
      %p163 = scmp.le.s32.totalorder 1, %s19
      %p164 = scmp.lt.s32.totalorder %s19, 3
      %p165 = pnand %p163, %p164
      %p166 = pneg %p165
      // Predicated region
      $region9: #{tpu_custom_call.1} parent=5 // pred_check
        _
      $region10: #{tpu_custom_call.1} parent=5 // pred_check_branch
        %168 = sbr.rel (%p165) target = $region12
      $region11: #{tpu_custom_call.1} parent=5 // pred_region
        %s169 = ssub.s32 %s19, 1
        // Predicated region
        $region13: #{tpu_custom_call.1} parent=11 // pred_check
          %p170 = pneg %p66
        $region14: #{tpu_custom_call.1} parent=11 // pred_check_branch
          %172 = sbr.rel (%p170) target = $region16
        $region15: #{tpu_custom_call.1} parent=11 // pred_region
          %174 = vsyncadd [#allocation6], 0
          %s175 = sshll.u32 %s1, 4
          %s176 = int_to_ptr.hbm [resolvable:$true] %s175
          %s177 = sshll.u32 [#allocation5], 4
          %s178 = int_to_ptr.vmem [resolvable:$true] %s177
          %183 = dma.hbm_to_vmem [thread:$0]  %s176, 2048, %s178, [#allocation6], 128, 128, 8
        $region16: #{tpu_custom_call.1} parent=11 // pred_fallthru
          _
        // Predicated region
        $region17: #{tpu_custom_call.1} parent=11 // pred_check
          %p184 = pneg %p87
        $region18: #{tpu_custom_call.1} parent=11 // pred_check_branch
          %186 = sbr.rel (%p184) target = $region20
        $region19: #{tpu_custom_call.1} parent=11 // pred_region
          %188 = vsyncadd [#allocation6], 0
          %s190 = sshll.u32 %s2, 4
          %s191 = int_to_ptr.hbm [resolvable:$true] %s190
          %s192 = sshll.u32 [#allocation7], 4
          %s193 = int_to_ptr.vmem [resolvable:$true] %s192
          %195 = dma.hbm_to_vmem [thread:$0]  %s191, 32, %s193, [#allocation6]
        $region20: #{tpu_custom_call.1} parent=11 // pred_fallthru
          _
        // Predicated region
        $region21: #{tpu_custom_call.1} parent=11 // pred_check
          %p196 = pneg %p108
        $region22: #{tpu_custom_call.1} parent=11 // pred_check_branch
          %198 = sbr.rel (%p196) target = $region24
        $region23: #{tpu_custom_call.1} parent=11 // pred_region
          %200 = vsyncadd [#allocation9], 0
          %s201 = sshll.u32 %s3, 4
          %s202 = int_to_ptr.hbm [resolvable:$true] %s201
          %s203 = sshll.u32 [#allocation8], 4
          %s204 = int_to_ptr.vmem [resolvable:$true] %s203
          %209 = dma.hbm_to_vmem [thread:$0]  %s202, 2048, %s204, [#allocation9], 64, 64, 4
        $region24: #{tpu_custom_call.1} parent=11 // pred_fallthru
          _
        // Predicated region
        $region25: #{tpu_custom_call.1} parent=11 // pred_check
          %p210 = pneg %p129
        $region26: #{tpu_custom_call.1} parent=11 // pred_check_branch
          %212 = sbr.rel (%p210) target = $region28
        $region27: #{tpu_custom_call.1} parent=11 // pred_region
          _
        $region28: #{tpu_custom_call.1} parent=11 // pred_fallthru
          _
      $region12: #{tpu_custom_call.1} parent=5 // pred_fallthru
        _
      %p213 = scmp.lt.s32.totalorder %s19, 2
      // Predicated region
      $region29: #{tpu_custom_call.1} parent=5 // pred_check
        %p214 = pneg %p213
      $region30: #{tpu_custom_call.1} parent=5 // pred_check_branch
        %216 = sbr.rel (%p214) target = $region32
      $region31: #{tpu_custom_call.1} parent=5 // pred_region
        // Predicated region
        $region33: #{tpu_custom_call.1} parent=31 // pred_check
          %p217 = pneg %p39
        $region34: #{tpu_custom_call.1} parent=31 // pred_check_branch
          %219 = sbr.rel (%p217) target = $region36
        $region35: #{tpu_custom_call.1} parent=31 // pred_region
          %s220 = sand.u32 %s29, 1
          %s221 = scalar_lea.sflag [#allocation3], %s220
          %s222 = sand.u32 %s29, 1
          %s223 = smul.addr %s222, 64
          %s224 = scalar_lea.vmem [#allocation2], %s223
          %s225 = smul.u32 8, %s19
          %227 = vsyncadd %s221, 0
          %s228 = smul.addr %s225, 8
          %s229 = scalar_lea.hbm %s0, %s228
          %s230 = sshll.u32 %s229, 4
          %s231 = int_to_ptr.hbm [resolvable:$true] %s230
          %s232 = sshll.u32 %s224, 4
          %s233 = int_to_ptr.vmem [resolvable:$true] %s232
          %238 = dma.hbm_to_vmem [thread:$0]  %s231, 1024, %s233, %s221, 128, 128, 8
        $region36: #{tpu_custom_call.1} parent=31 // pred_fallthru
          _
      $region32: #{tpu_custom_call.1} parent=5 // pred_fallthru
        _
      %p239 = scmp.le.s32.totalorder 1, %s19
      %p240 = scmp.lt.s32.totalorder %s19, 3
      %p241 = pnand %p239, %p240
      %p242 = pneg %p241
      // Predicated region
      $region37: #{tpu_custom_call.1} parent=5 // pred_check
        _
      $region38: #{tpu_custom_call.1} parent=5 // pred_check_branch
        %244 = sbr.rel (%p241) target = $region40
      $region39: #{tpu_custom_call.1} parent=5 // pred_region
        %s245 = ssub.s32 %s19, 1
        %s246 = sand.u32 %s32, 1
        %s247 = scalar_lea.sflag [#allocation3], %s246
        %s248 = sand.u32 %s32, 1
        %s249 = smul.addr %s248, 64
        %s250 = scalar_lea.vmem [#allocation2], %s249
        // Predicated region
        $region41: #{tpu_custom_call.1} parent=39 // pred_check
          %p251 = pneg %p45
        $region42: #{tpu_custom_call.1} parent=39 // pred_check_branch
          %253 = sbr.rel (%p251) target = $region44
        $region43: #{tpu_custom_call.1} parent=39 // pred_region
          %255 = dma.done %s247, 1024
        $region44: #{tpu_custom_call.1} parent=39 // pred_fallthru
          _
        // Predicated region
        $region45: #{tpu_custom_call.1} parent=39 // pred_check
          %p256 = pneg %p66
        $region46: #{tpu_custom_call.1} parent=39 // pred_check_branch
          %258 = sbr.rel (%p256) target = $region48
        $region47: #{tpu_custom_call.1} parent=39 // pred_region
          %260 = dma.done [#allocation6], 2048
        $region48: #{tpu_custom_call.1} parent=39 // pred_fallthru
          _
        // Predicated region
        $region49: #{tpu_custom_call.1} parent=39 // pred_check
          %p261 = pneg %p87
        $region50: #{tpu_custom_call.1} parent=39 // pred_check_branch
          %263 = sbr.rel (%p261) target = $region52
        $region51: #{tpu_custom_call.1} parent=39 // pred_region
          %265 = dma.done [#allocation6], 32
        $region52: #{tpu_custom_call.1} parent=39 // pred_fallthru
          _
        // Predicated region
        $region53: #{tpu_custom_call.1} parent=39 // pred_check
          %p266 = pneg %p108
        $region54: #{tpu_custom_call.1} parent=39 // pred_check_branch
          %268 = sbr.rel (%p266) target = $region56
        $region55: #{tpu_custom_call.1} parent=39 // pred_region
          %270 = dma.done [#allocation9], 2048
        $region56: #{tpu_custom_call.1} parent=39 // pred_fallthru
          _
        %s271 = sand.u32 %s32, 1
        %s272 = scalar_lea.sflag [#allocation3], %s271
        %s273 = sand.u32 %s32, 1
        %s274 = smul.addr %s273, 64
        %s275 = scalar_lea.vmem [#allocation2], %s274
        %p276 = pneg %p45
        %p277 = pneg %p42
        %p278 = pneg %p66
        %p279 = pneg %p63
        %p280 = pneg %p87
        %p281 = pneg %p84
        %p282 = pneg %p108
        %p283 = pneg %p105
        %p284 = pneg %p129
        %p285 = pneg %p126
        %p286 = pneg %p155
        %p287 = pneg %p152
        %s288 = sand.u32 %s142, 1
        %s289 = scalar_lea.sflag [#allocation4], %s288
        %s290 = sand.u32 %s142, 1
        %s291 = smul.addr %s290, 64
        %s292 = scalar_lea.vmem [#allocation10], %s291
        %s293 = smul.u32 8, %s24
        %s294 = smul.u32 8, %s24
        %v295 = vld [vmem:[%s250] sm:$0xff]
        %v296 = vld [vmem:[%s250 + $0x8] sm:$0xff]
        %v297 = vld [vmem:[%s250 + $0x10] sm:$0xff]
        %v298 = vld [vmem:[%s250 + $0x18] sm:$0xff]
        %v299 = vld [vmem:[%s250 + $0x20] sm:$0xff]
        %v300 = vld [vmem:[%s250 + $0x28] sm:$0xff]
        %v301 = vld [vmem:[%s250 + $0x30] sm:$0xff]
        %v302 = vld [vmem:[%s250 + $0x38] sm:$0xff]
        %v303 = vpack.c.bf16 %v296, %v295
        %v304 = vpack.c.bf16 %v298, %v297
        %v305 = vpack.c.bf16 %v300, %v299
        %v306 = vpack.c.bf16 %v302, %v301
        %v307 = vld [vmem:[#allocation5] sm:$0xff]
        %v308 = vld [vmem:[#allocation5 + $0x8] sm:$0xff]
        %v309 = vld [vmem:[#allocation5 + $0x10] sm:$0xff]
        %v310 = vld [vmem:[#allocation5 + $0x18] sm:$0xff]
        %v311 = vld [vmem:[#allocation5 + $0x20] sm:$0xff]
        %v312 = vld [vmem:[#allocation5 + $0x28] sm:$0xff]
        %v313 = vld [vmem:[#allocation5 + $0x30] sm:$0xff]
        %v314 = vld [vmem:[#allocation5 + $0x38] sm:$0xff]
        %v315 = vld [vmem:[#allocation5 + $0x40] sm:$0xff]
        %v316 = vld [vmem:[#allocation5 + $0x48] sm:$0xff]
        %v317 = vld [vmem:[#allocation5 + $0x50] sm:$0xff]
        %v318 = vld [vmem:[#allocation5 + $0x58] sm:$0xff]
        %v319 = vld [vmem:[#allocation5 + $0x60] sm:$0xff]
        %v320 = vld [vmem:[#allocation5 + $0x68] sm:$0xff]
        %v321 = vld [vmem:[#allocation5 + $0x70] sm:$0xff]
        %v322 = vld [vmem:[#allocation5 + $0x78] sm:$0xff]
        %v323 = vld [vmem:[#allocation7] sm:$0x3]
        %v325 = vperm.slane %v323, 0
        %v326 = vperm.slane %v323, 1
        %v345 = vunpack.c.l.b16 %v307
        %v346 = vunpack.c.h.b16 %v307
        %v347 = vunpack.c.l.b16 %v308
        %v348 = vunpack.c.h.b16 %v308
        %v349 = vunpack.c.l.b16 %v309
        %v350 = vunpack.c.h.b16 %v309
        %v351 = vunpack.c.l.b16 %v310
        %v352 = vunpack.c.h.b16 %v310
        %v353 = vunpack.c.l.b16 %v311
        %v354 = vunpack.c.h.b16 %v311
        %v355 = vunpack.c.l.b16 %v312
        %v356 = vunpack.c.h.b16 %v312
        %v357 = vunpack.c.l.b16 %v313
        %v358 = vunpack.c.h.b16 %v313
        %v359 = vunpack.c.l.b16 %v314
        %v360 = vunpack.c.h.b16 %v314
        %v361 = vunpack.c.l.b16 %v315
        %v362 = vunpack.c.h.b16 %v315
        %v363 = vunpack.c.l.b16 %v316
        %v364 = vunpack.c.h.b16 %v316
        %v365 = vunpack.c.l.b16 %v317
        %v366 = vunpack.c.h.b16 %v317
        %v367 = vunpack.c.l.b16 %v318
        %v368 = vunpack.c.h.b16 %v318
        %v369 = vunpack.c.l.b16 %v319
        %v370 = vunpack.c.h.b16 %v319
        %v371 = vunpack.c.l.b16 %v320
        %v372 = vunpack.c.h.b16 %v320
        %v373 = vunpack.c.l.b16 %v321
        %v374 = vunpack.c.h.b16 %v321
        %v375 = vunpack.c.l.b16 %v322
        %v376 = vunpack.c.h.b16 %v322
        %v377 = vpack.c.b16 %v347, %v345
        %v378 = vpack.c.b16 %v348, %v346
        %v379 = vpack.c.b16 %v351, %v349
        %v380 = vpack.c.b16 %v352, %v350
        %v381 = vpack.c.b16 %v355, %v353
        %v382 = vpack.c.b16 %v356, %v354
        %v383 = vpack.c.b16 %v359, %v357
        %v384 = vpack.c.b16 %v360, %v358
        %v385 = vpack.c.b16 %v363, %v361
        %v386 = vpack.c.b16 %v364, %v362
        %v387 = vpack.c.b16 %v367, %v365
        %v388 = vpack.c.b16 %v368, %v366
        %v389 = vpack.c.b16 %v371, %v369
        %v390 = vpack.c.b16 %v372, %v370
        %v391 = vpack.c.b16 %v375, %v373
        %v392 = vpack.c.b16 %v376, %v374
        %409 = vmatpush.bf16.msra.mxu0 %v391
        %410 = vmatpush.bf16.msra.mxu0 %v389
        %411 = vmatpush.bf16.msra.mxu0 %v387
        %412 = vmatpush.bf16.msra.mxu0 %v385
        %413 = vmatpush.bf16.msra.mxu0 %v383
        %414 = vmatpush.bf16.msra.mxu0 %v381
        %415 = vmatpush.bf16.msra.mxu0 %v379
        %416 = vmatpush.bf16.msra.mxu0 %v377
        %417 = vmatmul.bf16.gmra.mxu0 %v303
        %v418 = vpop.f32.mrf.mxu0
        %v419 = vadd.f32 %v325, %v418
        %v420 = vpop.f32.mrf.mxu0
        %v421 = vadd.f32 %v325, %v420
        %422 = vmatmul.bf16.gmra.mxu0 %v304
        %v423 = vpop.f32.mrf.mxu0
        %v424 = vadd.f32 %v325, %v423
        %v425 = vpop.f32.mrf.mxu0
        %v426 = vadd.f32 %v325, %v425
        %427 = vmatmul.bf16.gmra.mxu0 %v305
        %v428 = vpop.f32.mrf.mxu0
        %v429 = vadd.f32 %v325, %v428
        %v430 = vpop.f32.mrf.mxu0
        %v431 = vadd.f32 %v325, %v430
        %432 = vmatmul.bf16.gmra.mxu0 %v306
        %v433 = vpop.f32.mrf.mxu0
        %v434 = vadd.f32 %v325, %v433
        %v435 = vpop.f32.mrf.mxu0
        %v436 = vadd.f32 %v325, %v435
        %437 = vdwg.mxu0
        %438 = vmatpush.bf16.msra.mxu0 %v392
        %439 = vmatpush.bf16.msra.mxu0 %v390
        %440 = vmatpush.bf16.msra.mxu0 %v388
        %441 = vmatpush.bf16.msra.mxu0 %v386
        %442 = vmatpush.bf16.msra.mxu0 %v384
        %443 = vmatpush.bf16.msra.mxu0 %v382
        %444 = vmatpush.bf16.msra.mxu0 %v380
        %445 = vmatpush.bf16.msra.mxu0 %v378
        %446 = vmatmul.bf16.gmra.mxu0 %v303
        %v447 = vpop.f32.mrf.mxu0
        %v448 = vadd.f32 %v326, %v447
        %v449 = vpop.f32.mrf.mxu0
        %v450 = vadd.f32 %v326, %v449
        %451 = vmatmul.bf16.gmra.mxu0 %v304
        %v452 = vpop.f32.mrf.mxu0
        %v453 = vadd.f32 %v326, %v452
        %v454 = vpop.f32.mrf.mxu0
        %v455 = vadd.f32 %v326, %v454
        %456 = vmatmul.bf16.gmra.mxu0 %v305
        %v457 = vpop.f32.mrf.mxu0
        %v458 = vadd.f32 %v326, %v457
        %v459 = vpop.f32.mrf.mxu0
        %v460 = vadd.f32 %v326, %v459
        %461 = vmatmul.bf16.gmra.mxu0 %v306
        %v462 = vpop.f32.mrf.mxu0
        %v463 = vadd.f32 %v326, %v462
        %v464 = vpop.f32.mrf.mxu0
        %v465 = vadd.f32 %v326, %v464
        %466 = vdwg.mxu0
        %v467 = vmul.f32 %v419, 0.5
        %v468 = vmul.f32 %v448, 0.5
        %v469 = vmul.f32 %v421, 0.5
        %v470 = vmul.f32 %v450, 0.5
        %v471 = vmul.f32 %v424, 0.5
        %v472 = vmul.f32 %v453, 0.5
        %v473 = vmul.f32 %v426, 0.5
        %v474 = vmul.f32 %v455, 0.5
        %v475 = vmul.f32 %v429, 0.5
        %v476 = vmul.f32 %v458, 0.5
        %v477 = vmul.f32 %v431, 0.5
        %v478 = vmul.f32 %v460, 0.5
        %v479 = vmul.f32 %v434, 0.5
        %v480 = vmul.f32 %v463, 0.5
        %v481 = vmul.f32 %v436, 0.5
        %v482 = vmul.f32 %v465, 0.5
        %v483 = vmul.f32 %v419, 0.70710677
        %v484 = vmul.f32 %v448, 0.70710677
        %v485 = vmul.f32 %v421, 0.70710677
        %v486 = vmul.f32 %v450, 0.70710677
        %v487 = vmul.f32 %v424, 0.70710677
        %v488 = vmul.f32 %v453, 0.70710677
        %v489 = vmul.f32 %v426, 0.70710677
        %v490 = vmul.f32 %v455, 0.70710677
        %v491 = vmul.f32 %v429, 0.70710677
        %v492 = vmul.f32 %v458, 0.70710677
        %v493 = vmul.f32 %v431, 0.70710677
        %v494 = vmul.f32 %v460, 0.70710677
        %v495 = vmul.f32 %v434, 0.70710677
        %v496 = vmul.f32 %v463, 0.70710677
        %v497 = vmul.f32 %v436, 0.70710677
        %v498 = vmul.f32 %v465, 0.70710677
        %v499 = vand.u32 2147483647, %v483
        %v500 = vand.u32 2147483647, %v484
        %v501 = vand.u32 2147483647, %v485
        %v502 = vand.u32 2147483647, %v486
        %v503 = vand.u32 2147483647, %v487
        %v504 = vand.u32 2147483647, %v488
        %v505 = vand.u32 2147483647, %v489
        %v506 = vand.u32 2147483647, %v490
        %v507 = vand.u32 2147483647, %v491
        %v508 = vand.u32 2147483647, %v492
        %v509 = vand.u32 2147483647, %v493
        %v510 = vand.u32 2147483647, %v494
        %v511 = vand.u32 2147483647, %v495
        %v512 = vand.u32 2147483647, %v496
        %v513 = vand.u32 2147483647, %v497
        %v514 = vand.u32 2147483647, %v498
        %v515 = vmul.f32 %v499, 0.3275911
        %v516 = vmul.f32 %v500, 0.3275911
        %v517 = vmul.f32 %v501, 0.3275911
        %v518 = vmul.f32 %v502, 0.3275911
        %v519 = vmul.f32 %v503, 0.3275911
        %v520 = vmul.f32 %v504, 0.3275911
        %v521 = vmul.f32 %v505, 0.3275911
        %v522 = vmul.f32 %v506, 0.3275911
        %v523 = vmul.f32 %v507, 0.3275911
        %v524 = vmul.f32 %v508, 0.3275911
        %v525 = vmul.f32 %v509, 0.3275911
        %v526 = vmul.f32 %v510, 0.3275911
        %v527 = vmul.f32 %v511, 0.3275911
        %v528 = vmul.f32 %v512, 0.3275911
        %v529 = vmul.f32 %v513, 0.3275911
        %v530 = vmul.f32 %v514, 0.3275911
        %v531 = vadd.f32 %v515, 1.0
        %v532 = vadd.f32 %v516, 1.0
        %v533 = vadd.f32 %v517, 1.0
        %v534 = vadd.f32 %v518, 1.0
        %v535 = vadd.f32 %v519, 1.0
        %v536 = vadd.f32 %v520, 1.0
        %v537 = vadd.f32 %v521, 1.0
        %v538 = vadd.f32 %v522, 1.0
        %v539 = vadd.f32 %v523, 1.0
        %v540 = vadd.f32 %v524, 1.0
        %v541 = vadd.f32 %v525, 1.0
        %v542 = vadd.f32 %v526, 1.0
        %v543 = vadd.f32 %v527, 1.0
        %v544 = vadd.f32 %v528, 1.0
        %v545 = vadd.f32 %v529, 1.0
        %v546 = vadd.f32 %v530, 1.0
        %v547 = vrcp.pop %v531
        %v548 = vrcp.pop %v532
        %v549 = vrcp.pop %v533
        %v550 = vrcp.pop %v534
        %v551 = vrcp.pop %v535
        %v552 = vrcp.pop %v536
        %v553 = vrcp.pop %v537
        %v554 = vrcp.pop %v538
        %v555 = vrcp.pop %v539
        %v556 = vrcp.pop %v540
        %v557 = vrcp.pop %v541
        %v558 = vrcp.pop %v542
        %v559 = vrcp.pop %v543
        %v560 = vrcp.pop %v544
        %v561 = vrcp.pop %v545
        %v562 = vrcp.pop %v546
        %v563 = vmul.f32 %v547, 1.0614054
        %v564 = vmul.f32 %v548, 1.0614054
        %v565 = vmul.f32 %v549, 1.0614054
        %v566 = vmul.f32 %v550, 1.0614054
        %v567 = vmul.f32 %v551, 1.0614054
        %v568 = vmul.f32 %v552, 1.0614054
        %v569 = vmul.f32 %v553, 1.0614054
        %v570 = vmul.f32 %v554, 1.0614054
        %v571 = vmul.f32 %v555, 1.0614054
        %v572 = vmul.f32 %v556, 1.0614054
        %v573 = vmul.f32 %v557, 1.0614054
        %v574 = vmul.f32 %v558, 1.0614054
        %v575 = vmul.f32 %v559, 1.0614054
        %v576 = vmul.f32 %v560, 1.0614054
        %v577 = vmul.f32 %v561, 1.0614054
        %v578 = vmul.f32 %v562, 1.0614054
        %v579 = vadd.f32 %v563, -1.4531521
        %v580 = vadd.f32 %v564, -1.4531521
        %v581 = vadd.f32 %v565, -1.4531521
        %v582 = vadd.f32 %v566, -1.4531521
        %v583 = vadd.f32 %v567, -1.4531521
        %v584 = vadd.f32 %v568, -1.4531521
        %v585 = vadd.f32 %v569, -1.4531521
        %v586 = vadd.f32 %v570, -1.4531521
        %v587 = vadd.f32 %v571, -1.4531521
        %v588 = vadd.f32 %v572, -1.4531521
        %v589 = vadd.f32 %v573, -1.4531521
        %v590 = vadd.f32 %v574, -1.4531521
        %v591 = vadd.f32 %v575, -1.4531521
        %v592 = vadd.f32 %v576, -1.4531521
        %v593 = vadd.f32 %v577, -1.4531521
        %v594 = vadd.f32 %v578, -1.4531521
        %v595 = vmul.f32 %v579, %v547
        %v596 = vmul.f32 %v580, %v548
        %v597 = vmul.f32 %v581, %v549
        %v598 = vmul.f32 %v582, %v550
        %v599 = vmul.f32 %v583, %v551
        %v600 = vmul.f32 %v584, %v552
        %v601 = vmul.f32 %v585, %v553
        %v602 = vmul.f32 %v586, %v554
        %v603 = vmul.f32 %v587, %v555
        %v604 = vmul.f32 %v588, %v556
        %v605 = vmul.f32 %v589, %v557
        %v606 = vmul.f32 %v590, %v558
        %v607 = vmul.f32 %v591, %v559
        %v608 = vmul.f32 %v592, %v560
        %v609 = vmul.f32 %v593, %v561
        %v610 = vmul.f32 %v594, %v562
        %v611 = vadd.f32 %v595, 1.4214138
        %v612 = vadd.f32 %v596, 1.4214138
        %v613 = vadd.f32 %v597, 1.4214138
        %v614 = vadd.f32 %v598, 1.4214138
        %v615 = vadd.f32 %v599, 1.4214138
        %v616 = vadd.f32 %v600, 1.4214138
        %v617 = vadd.f32 %v601, 1.4214138
        %v618 = vadd.f32 %v602, 1.4214138
        %v619 = vadd.f32 %v603, 1.4214138
        %v620 = vadd.f32 %v604, 1.4214138
        %v621 = vadd.f32 %v605, 1.4214138
        %v622 = vadd.f32 %v606, 1.4214138
        %v623 = vadd.f32 %v607, 1.4214138
        %v624 = vadd.f32 %v608, 1.4214138
        %v625 = vadd.f32 %v609, 1.4214138
        %v626 = vadd.f32 %v610, 1.4214138
        %v627 = vmul.f32 %v611, %v547
        %v628 = vmul.f32 %v612, %v548
        %v629 = vmul.f32 %v613, %v549
        %v630 = vmul.f32 %v614, %v550
        %v631 = vmul.f32 %v615, %v551
        %v632 = vmul.f32 %v616, %v552
        %v633 = vmul.f32 %v617, %v553
        %v634 = vmul.f32 %v618, %v554
        %v635 = vmul.f32 %v619, %v555
        %v636 = vmul.f32 %v620, %v556
        %v637 = vmul.f32 %v621, %v557
        %v638 = vmul.f32 %v622, %v558
        %v639 = vmul.f32 %v623, %v559
        %v640 = vmul.f32 %v624, %v560
        %v641 = vmul.f32 %v625, %v561
        %v642 = vmul.f32 %v626, %v562
        %v643 = vadd.f32 %v627, -0.28449672
        %v644 = vadd.f32 %v628, -0.28449672
        %v645 = vadd.f32 %v629, -0.28449672
        %v646 = vadd.f32 %v630, -0.28449672
        %v647 = vadd.f32 %v631, -0.28449672
        %v648 = vadd.f32 %v632, -0.28449672
        %v649 = vadd.f32 %v633, -0.28449672
        %v650 = vadd.f32 %v634, -0.28449672
        %v651 = vadd.f32 %v635, -0.28449672
        %v652 = vadd.f32 %v636, -0.28449672
        %v653 = vadd.f32 %v637, -0.28449672
        %v654 = vadd.f32 %v638, -0.28449672
        %v655 = vadd.f32 %v639, -0.28449672
        %v656 = vadd.f32 %v640, -0.28449672
        %v657 = vadd.f32 %v641, -0.28449672
        %v658 = vadd.f32 %v642, -0.28449672
        %v659 = vmul.f32 %v643, %v547
        %v660 = vmul.f32 %v644, %v548
        %v661 = vmul.f32 %v645, %v549
        %v662 = vmul.f32 %v646, %v550
        %v663 = vmul.f32 %v647, %v551
        %v664 = vmul.f32 %v648, %v552
        %v665 = vmul.f32 %v649, %v553
        %v666 = vmul.f32 %v650, %v554
        %v667 = vmul.f32 %v651, %v555
        %v668 = vmul.f32 %v652, %v556
        %v669 = vmul.f32 %v653, %v557
        %v670 = vmul.f32 %v654, %v558
        %v671 = vmul.f32 %v655, %v559
        %v672 = vmul.f32 %v656, %v560
        %v673 = vmul.f32 %v657, %v561
        %v674 = vmul.f32 %v658, %v562
        %v675 = vadd.f32 %v659, 0.2548296
        %v676 = vadd.f32 %v660, 0.2548296
        %v677 = vadd.f32 %v661, 0.2548296
        %v678 = vadd.f32 %v662, 0.2548296
        %v679 = vadd.f32 %v663, 0.2548296
        %v680 = vadd.f32 %v664, 0.2548296
        %v681 = vadd.f32 %v665, 0.2548296
        %v682 = vadd.f32 %v666, 0.2548296
        %v683 = vadd.f32 %v667, 0.2548296
        %v684 = vadd.f32 %v668, 0.2548296
        %v685 = vadd.f32 %v669, 0.2548296
        %v686 = vadd.f32 %v670, 0.2548296
        %v687 = vadd.f32 %v671, 0.2548296
        %v688 = vadd.f32 %v672, 0.2548296
        %v689 = vadd.f32 %v673, 0.2548296
        %v690 = vadd.f32 %v674, 0.2548296
        %v691 = vmul.f32 %v675, %v547
        %v692 = vmul.f32 %v676, %v548
        %v693 = vmul.f32 %v677, %v549
        %v694 = vmul.f32 %v678, %v550
        %v695 = vmul.f32 %v679, %v551
        %v696 = vmul.f32 %v680, %v552
        %v697 = vmul.f32 %v681, %v553
        %v698 = vmul.f32 %v682, %v554
        %v699 = vmul.f32 %v683, %v555
        %v700 = vmul.f32 %v684, %v556
        %v701 = vmul.f32 %v685, %v557
        %v702 = vmul.f32 %v686, %v558
        %v703 = vmul.f32 %v687, %v559
        %v704 = vmul.f32 %v688, %v560
        %v705 = vmul.f32 %v689, %v561
        %v706 = vmul.f32 %v690, %v562
        %v707 = vmul.f32 %v483, %v483
        %v708 = vmul.f32 %v484, %v484
        %v709 = vmul.f32 %v485, %v485
        %v710 = vmul.f32 %v486, %v486
        %v711 = vmul.f32 %v487, %v487
        %v712 = vmul.f32 %v488, %v488
        %v713 = vmul.f32 %v489, %v489
        %v714 = vmul.f32 %v490, %v490
        %v715 = vmul.f32 %v491, %v491
        %v716 = vmul.f32 %v492, %v492
        %v717 = vmul.f32 %v493, %v493
        %v718 = vmul.f32 %v494, %v494
        %v719 = vmul.f32 %v495, %v495
        %v720 = vmul.f32 %v496, %v496
        %v721 = vmul.f32 %v497, %v497
        %v722 = vmul.f32 %v498, %v498
        %v723 = vsub.f32 0.0, %v707
        %v724 = vsub.f32 0.0, %v708
        %v725 = vsub.f32 0.0, %v709
        %v726 = vsub.f32 0.0, %v710
        %v727 = vsub.f32 0.0, %v711
        %v728 = vsub.f32 0.0, %v712
        %v729 = vsub.f32 0.0, %v713
        %v730 = vsub.f32 0.0, %v714
        %v731 = vsub.f32 0.0, %v715
        %v732 = vsub.f32 0.0, %v716
        %v733 = vsub.f32 0.0, %v717
        %v734 = vsub.f32 0.0, %v718
        %v735 = vsub.f32 0.0, %v719
        %v736 = vsub.f32 0.0, %v720
        %v737 = vsub.f32 0.0, %v721
        %v738 = vsub.f32 0.0, %v722
        %v739 = vmul.f32 %v723, 1.442695
        %v740 = vpow.pop %v739
        %v741 = vmul.f32 %v724, 1.442695
        %v742 = vpow.pop %v741
        %v743 = vmul.f32 %v725, 1.442695
        %v744 = vpow.pop %v743
        %v745 = vmul.f32 %v726, 1.442695
        %v746 = vpow.pop %v745
        %v747 = vmul.f32 %v727, 1.442695
        %v748 = vpow.pop %v747
        %v749 = vmul.f32 %v728, 1.442695
        %v750 = vpow.pop %v749
        %v751 = vmul.f32 %v729, 1.442695
        %v752 = vpow.pop %v751
        %v753 = vmul.f32 %v730, 1.442695
        %v754 = vpow.pop %v753
        %v755 = vmul.f32 %v731, 1.442695
        %v756 = vpow.pop %v755
        %v757 = vmul.f32 %v732, 1.442695
        %v758 = vpow.pop %v757
        %v759 = vmul.f32 %v733, 1.442695
        %v760 = vpow.pop %v759
        %v761 = vmul.f32 %v734, 1.442695
        %v762 = vpow.pop %v761
        %v763 = vmul.f32 %v735, 1.442695
        %v764 = vpow.pop %v763
        %v765 = vmul.f32 %v736, 1.442695
        %v766 = vpow.pop %v765
        %v767 = vmul.f32 %v737, 1.442695
        %v768 = vpow.pop %v767
        %v769 = vmul.f32 %v738, 1.442695
        %v770 = vpow.pop %v769
        %v771 = vmul.f32 %v691, %v740
        %v772 = vmul.f32 %v692, %v742
        %v773 = vmul.f32 %v693, %v744
        %v774 = vmul.f32 %v694, %v746
        %v775 = vmul.f32 %v695, %v748
        %v776 = vmul.f32 %v696, %v750
        %v777 = vmul.f32 %v697, %v752
        %v778 = vmul.f32 %v698, %v754
        %v779 = vmul.f32 %v699, %v756
        %v780 = vmul.f32 %v700, %v758
        %v781 = vmul.f32 %v701, %v760
        %v782 = vmul.f32 %v702, %v762
        %v783 = vmul.f32 %v703, %v764
        %v784 = vmul.f32 %v704, %v766
        %v785 = vmul.f32 %v705, %v768
        %v786 = vmul.f32 %v706, %v770
        %v787 = vsub.f32 1.0, %v771
        %v788 = vsub.f32 1.0, %v772
        %v789 = vsub.f32 1.0, %v773
        %v790 = vsub.f32 1.0, %v774
        %v791 = vsub.f32 1.0, %v775
        %v792 = vsub.f32 1.0, %v776
        %v793 = vsub.f32 1.0, %v777
        %v794 = vsub.f32 1.0, %v778
        %v795 = vsub.f32 1.0, %v779
        %v796 = vsub.f32 1.0, %v780
        %v797 = vsub.f32 1.0, %v781
        %v798 = vsub.f32 1.0, %v782
        %v799 = vsub.f32 1.0, %v783
        %v800 = vsub.f32 1.0, %v784
        %v801 = vsub.f32 1.0, %v785
        %v802 = vsub.f32 1.0, %v786
        %vm803 = vcmp.lt.f32.partialorder %v483, 0.0
        %vm804 = vcmp.lt.f32.partialorder %v484, 0.0
        %vm805 = vcmp.lt.f32.partialorder %v485, 0.0
        %vm806 = vcmp.lt.f32.partialorder %v486, 0.0
        %vm807 = vcmp.lt.f32.partialorder %v487, 0.0
        %vm808 = vcmp.lt.f32.partialorder %v488, 0.0
        %vm809 = vcmp.lt.f32.partialorder %v489, 0.0
        %vm810 = vcmp.lt.f32.partialorder %v490, 0.0
        %vm811 = vcmp.lt.f32.partialorder %v491, 0.0
        %vm812 = vcmp.lt.f32.partialorder %v492, 0.0
        %vm813 = vcmp.lt.f32.partialorder %v493, 0.0
        %vm814 = vcmp.lt.f32.partialorder %v494, 0.0
        %vm815 = vcmp.lt.f32.partialorder %v495, 0.0
        %vm816 = vcmp.lt.f32.partialorder %v496, 0.0
        %vm817 = vcmp.lt.f32.partialorder %v497, 0.0
        %vm818 = vcmp.lt.f32.partialorder %v498, 0.0
        %v819 = vsub.f32 0.0, %v787
        %v820 = vsub.f32 0.0, %v788
        %v821 = vsub.f32 0.0, %v789
        %v822 = vsub.f32 0.0, %v790
        %v823 = vsub.f32 0.0, %v791
        %v824 = vsub.f32 0.0, %v792
        %v825 = vsub.f32 0.0, %v793
        %v826 = vsub.f32 0.0, %v794
        %v827 = vsub.f32 0.0, %v795
        %v828 = vsub.f32 0.0, %v796
        %v829 = vsub.f32 0.0, %v797
        %v830 = vsub.f32 0.0, %v798
        %v831 = vsub.f32 0.0, %v799
        %v832 = vsub.f32 0.0, %v800
        %v833 = vsub.f32 0.0, %v801
        %v834 = vsub.f32 0.0, %v802
        %v835 = vsel %vm803, %v819, %v787
        %v836 = vsel %vm804, %v820, %v788
        %v837 = vsel %vm805, %v821, %v789
        %v838 = vsel %vm806, %v822, %v790
        %v839 = vsel %vm807, %v823, %v791
        %v840 = vsel %vm808, %v824, %v792
        %v841 = vsel %vm809, %v825, %v793
        %v842 = vsel %vm810, %v826, %v794
        %v843 = vsel %vm811, %v827, %v795
        %v844 = vsel %vm812, %v828, %v796
        %v845 = vsel %vm813, %v829, %v797
        %v846 = vsel %vm814, %v830, %v798
        %v847 = vsel %vm815, %v831, %v799
        %v848 = vsel %vm816, %v832, %v800
        %v849 = vsel %vm817, %v833, %v801
        %v850 = vsel %vm818, %v834, %v802
        %v851 = vadd.f32 %v835, 1.0
        %v852 = vadd.f32 %v836, 1.0
        %v853 = vadd.f32 %v837, 1.0
        %v854 = vadd.f32 %v838, 1.0
        %v855 = vadd.f32 %v839, 1.0
        %v856 = vadd.f32 %v840, 1.0
        %v857 = vadd.f32 %v841, 1.0
        %v858 = vadd.f32 %v842, 1.0
        %v859 = vadd.f32 %v843, 1.0
        %v860 = vadd.f32 %v844, 1.0
        %v861 = vadd.f32 %v845, 1.0
        %v862 = vadd.f32 %v846, 1.0
        %v863 = vadd.f32 %v847, 1.0
        %v864 = vadd.f32 %v848, 1.0
        %v865 = vadd.f32 %v849, 1.0
        %v866 = vadd.f32 %v850, 1.0
        %v867 = vmul.f32 %v467, %v851
        %v868 = vmul.f32 %v468, %v852
        %v869 = vmul.f32 %v469, %v853
        %v870 = vmul.f32 %v470, %v854
        %v871 = vmul.f32 %v471, %v855
        %v872 = vmul.f32 %v472, %v856
        %v873 = vmul.f32 %v473, %v857
        %v874 = vmul.f32 %v474, %v858
        %v875 = vmul.f32 %v475, %v859
        %v876 = vmul.f32 %v476, %v860
        %v877 = vmul.f32 %v477, %v861
        %v878 = vmul.f32 %v478, %v862
        %v879 = vmul.f32 %v479, %v863
        %v880 = vmul.f32 %v480, %v864
        %v881 = vmul.f32 %v481, %v865
        %v882 = vmul.f32 %v482, %v866
        %v883 = vpack.c.bf16 %v869, %v867
        %v884 = vpack.c.bf16 %v870, %v868
        %v885 = vpack.c.bf16 %v873, %v871
        %v886 = vpack.c.bf16 %v874, %v872
        %v887 = vpack.c.bf16 %v877, %v875
        %v888 = vpack.c.bf16 %v878, %v876
        %v889 = vpack.c.bf16 %v881, %v879
        %v890 = vpack.c.bf16 %v882, %v880
        %v891 = vld [vmem:[#allocation8] sm:$0xf]
        %v892 = vld [vmem:[#allocation8 + $0x4] sm:$0xf]
        %v893 = vld [vmem:[#allocation8 + $0x8] sm:$0xf]
        %v894 = vld [vmem:[#allocation8 + $0xc] sm:$0xf]
        %v895 = vld [vmem:[#allocation8 + $0x10] sm:$0xf]
        %v896 = vld [vmem:[#allocation8 + $0x14] sm:$0xf]
        %v897 = vld [vmem:[#allocation8 + $0x18] sm:$0xf]
        %v898 = vld [vmem:[#allocation8 + $0x1c] sm:$0xf]
        %v899 = vld [vmem:[#allocation8 + $0x20] sm:$0xf]
        %v900 = vld [vmem:[#allocation8 + $0x24] sm:$0xf]
        %v901 = vld [vmem:[#allocation8 + $0x28] sm:$0xf]
        %v902 = vld [vmem:[#allocation8 + $0x2c] sm:$0xf]
        %v903 = vld [vmem:[#allocation8 + $0x30] sm:$0xf]
        %v904 = vld [vmem:[#allocation8 + $0x34] sm:$0xf]
        %v905 = vld [vmem:[#allocation8 + $0x38] sm:$0xf]
        %v906 = vld [vmem:[#allocation8 + $0x3c] sm:$0xf]
        %v907 = vld [vmem:[#allocation8 + $0x40] sm:$0xf]
        %v908 = vld [vmem:[#allocation8 + $0x44] sm:$0xf]
        %v909 = vld [vmem:[#allocation8 + $0x48] sm:$0xf]
        %v910 = vld [vmem:[#allocation8 + $0x4c] sm:$0xf]
        %v911 = vld [vmem:[#allocation8 + $0x50] sm:$0xf]
        %v912 = vld [vmem:[#allocation8 + $0x54] sm:$0xf]
        %v913 = vld [vmem:[#allocation8 + $0x58] sm:$0xf]
        %v914 = vld [vmem:[#allocation8 + $0x5c] sm:$0xf]
        %v915 = vld [vmem:[#allocation8 + $0x60] sm:$0xf]
        %v916 = vld [vmem:[#allocation8 + $0x64] sm:$0xf]
        %v917 = vld [vmem:[#allocation8 + $0x68] sm:$0xf]
        %v918 = vld [vmem:[#allocation8 + $0x6c] sm:$0xf]
        %v919 = vld [vmem:[#allocation8 + $0x70] sm:$0xf]
        %v920 = vld [vmem:[#allocation8 + $0x74] sm:$0xf]
        %v921 = vld [vmem:[#allocation8 + $0x78] sm:$0xf]
        %v922 = vld [vmem:[#allocation8 + $0x7c] sm:$0xf]
        %v923 = vld [vmem:[%s4] sm:$0x1]
        %v925 = vperm.slane %v923, 0
        %v959 = vunpack.c.l.b16 %v891
        %v960 = vunpack.c.l.b16 %v892
        %v961 = vunpack.c.l.b16 %v893
        %v962 = vunpack.c.l.b16 %v894
        %v963 = vunpack.c.l.b16 %v895
        %v964 = vunpack.c.l.b16 %v896
        %v965 = vunpack.c.l.b16 %v897
        %v966 = vunpack.c.l.b16 %v898
        %v967 = vunpack.c.l.b16 %v899
        %v968 = vunpack.c.l.b16 %v900
        %v969 = vunpack.c.l.b16 %v901
        %v970 = vunpack.c.l.b16 %v902
        %v971 = vunpack.c.l.b16 %v903
        %v972 = vunpack.c.l.b16 %v904
        %v973 = vunpack.c.l.b16 %v905
        %v974 = vunpack.c.l.b16 %v906
        %v975 = vunpack.c.l.b16 %v907
        %v976 = vunpack.c.l.b16 %v908
        %v977 = vunpack.c.l.b16 %v909
        %v978 = vunpack.c.l.b16 %v910
        %v979 = vunpack.c.l.b16 %v911
        %v980 = vunpack.c.l.b16 %v912
        %v981 = vunpack.c.l.b16 %v913
        %v982 = vunpack.c.l.b16 %v914
        %v983 = vunpack.c.l.b16 %v915
        %v984 = vunpack.c.l.b16 %v916
        %v985 = vunpack.c.l.b16 %v917
        %v986 = vunpack.c.l.b16 %v918
        %v987 = vunpack.c.l.b16 %v919
        %v988 = vunpack.c.l.b16 %v920
        %v989 = vunpack.c.l.b16 %v921
        %v990 = vunpack.c.l.b16 %v922
        %v991 = vpack.c.b16 %v960, %v959
        %v992 = vpack.c.b16 %v962, %v961
        %v993 = vpack.c.b16 %v964, %v963
        %v994 = vpack.c.b16 %v966, %v965
        %v995 = vpack.c.b16 %v968, %v967
        %v996 = vpack.c.b16 %v970, %v969
        %v997 = vpack.c.b16 %v972, %v971
        %v998 = vpack.c.b16 %v974, %v973
        %v999 = vpack.c.b16 %v976, %v975
        %v1000 = vpack.c.b16 %v978, %v977
        %v1001 = vpack.c.b16 %v980, %v979
        %v1002 = vpack.c.b16 %v982, %v981
        %v1003 = vpack.c.b16 %v984, %v983
        %v1004 = vpack.c.b16 %v986, %v985
        %v1005 = vpack.c.b16 %v988, %v987
        %v1006 = vpack.c.b16 %v990, %v989
        %1023 = vmatpush.bf16.msra.mxu0 %v998
        %1024 = vmatpush.bf16.msra.mxu0 %v997
        %1025 = vmatpush.bf16.msra.mxu0 %v996
        %1026 = vmatpush.bf16.msra.mxu0 %v995
        %1027 = vmatpush.bf16.msra.mxu0 %v994
        %1028 = vmatpush.bf16.msra.mxu0 %v993
        %1029 = vmatpush.bf16.msra.mxu0 %v992
        %1030 = vmatpush.bf16.msra.mxu0 %v991
        %1031 = vmatmul.bf16.gmra.mxu0 %v883
        %v1032 = vpop.f32.mrf.mxu0
        %v1033 = vadd.f32 %v925, %v1032
        %v1034 = vpop.f32.mrf.mxu0
        %v1035 = vadd.f32 %v925, %v1034
        %1036 = vmatmul.bf16.gmra.mxu0 %v885
        %v1037 = vpop.f32.mrf.mxu0
        %v1038 = vadd.f32 %v925, %v1037
        %v1039 = vpop.f32.mrf.mxu0
        %v1040 = vadd.f32 %v925, %v1039
        %1041 = vmatmul.bf16.gmra.mxu0 %v887
        %v1042 = vpop.f32.mrf.mxu0
        %v1043 = vadd.f32 %v925, %v1042
        %v1044 = vpop.f32.mrf.mxu0
        %v1045 = vadd.f32 %v925, %v1044
        %1046 = vmatmul.bf16.gmra.mxu0 %v889
        %v1047 = vpop.f32.mrf.mxu0
        %v1048 = vadd.f32 %v925, %v1047
        %v1049 = vpop.f32.mrf.mxu0
        %v1050 = vadd.f32 %v925, %v1049
        %1051 = vdwg.mxu0
        %1052 = vmatpush.bf16.msra.mxu0 %v1006
        %1053 = vmatpush.bf16.msra.mxu0 %v1005
        %1054 = vmatpush.bf16.msra.mxu0 %v1004
        %1055 = vmatpush.bf16.msra.mxu0 %v1003
        %1056 = vmatpush.bf16.msra.mxu0 %v1002
        %1057 = vmatpush.bf16.msra.mxu0 %v1001
        %1058 = vmatpush.bf16.msra.mxu0 %v1000
        %1059 = vmatpush.bf16.msra.mxu0 %v999
        %1060 = vmatmul.bf16.gmra.mxu0 %v884
        %v1061 = vpop.f32.mrf.mxu0
        %v1062 = vadd.f32 %v1033, %v1061
        %v1063 = vpop.f32.mrf.mxu0
        %v1064 = vadd.f32 %v1035, %v1063
        %1065 = vmatmul.bf16.gmra.mxu0 %v886
        %v1066 = vpop.f32.mrf.mxu0
        %v1067 = vadd.f32 %v1038, %v1066
        %v1068 = vpop.f32.mrf.mxu0
        %v1069 = vadd.f32 %v1040, %v1068
        %1070 = vmatmul.bf16.gmra.mxu0 %v888
        %v1071 = vpop.f32.mrf.mxu0
        %v1072 = vadd.f32 %v1043, %v1071
        %v1073 = vpop.f32.mrf.mxu0
        %v1074 = vadd.f32 %v1045, %v1073
        %1075 = vmatmul.bf16.gmra.mxu0 %v890
        %v1076 = vpop.f32.mrf.mxu0
        %v1077 = vadd.f32 %v1048, %v1076
        %v1078 = vpop.f32.mrf.mxu0
        %v1079 = vadd.f32 %v1050, %v1078
        %1080 = vdwg.mxu0
        %1081 = vst [vmem:[%s292] sm:$0xff] %v1062
        %1082 = vst [vmem:[%s292 + $0x8] sm:$0xff] %v1064
        %1083 = vst [vmem:[%s292 + $0x10] sm:$0xff] %v1067
        %1084 = vst [vmem:[%s292 + $0x18] sm:$0xff] %v1069
        %1085 = vst [vmem:[%s292 + $0x20] sm:$0xff] %v1072
        %1086 = vst [vmem:[%s292 + $0x28] sm:$0xff] %v1074
        %1087 = vst [vmem:[%s292 + $0x30] sm:$0xff] %v1077
        %1088 = vst [vmem:[%s292 + $0x38] sm:$0xff] %v1079
        %s1089 = sand.u32 %s142, 1
        %s1090 = scalar_lea.sflag [#allocation4], %s1089
        %s1091 = sand.u32 %s142, 1
        %s1092 = smul.addr %s1091, 64
        %s1093 = scalar_lea.vmem [#allocation10], %s1092
        // Predicated region
        $region57: #{tpu_custom_call.1} parent=39 // pred_check
          %p1094 = pneg %p152
        $region58: #{tpu_custom_call.1} parent=39 // pred_check_branch
          %1096 = sbr.rel (%p1094) target = $region60
        $region59: #{tpu_custom_call.1} parent=39 // pred_region
          %s1097 = smul.u32 8, %s24
          %1099 = vsyncadd %s1090, 0
          %s1100 = smul.addr %s1097, 8
          %s1101 = scalar_lea.hbm %s5, %s1100
          %s1102 = sshll.u32 %s1093, 4
          %s1103 = int_to_ptr.vmem [resolvable:$true] %s1102
          %s1104 = sshll.u32 %s1101, 4
          %s1105 = int_to_ptr.hbm [resolvable:$true] %s1104
          %1110 = dma.vmem_to_hbm [thread:$0]  %s1103, 1024, %s1105, %s1090, 128, 128, 8
        $region60: #{tpu_custom_call.1} parent=39 // pred_fallthru
          _
      $region40: #{tpu_custom_call.1} parent=5 // pred_fallthru
        _
      %p1111 = scmp.le.s32.totalorder 2, %s19
      // Predicated region
      $region61: #{tpu_custom_call.1} parent=5 // pred_check
        %p1112 = pneg %p1111
      $region62: #{tpu_custom_call.1} parent=5 // pred_check_branch
        %1114 = sbr.rel (%p1112) target = $region64
      $region63: #{tpu_custom_call.1} parent=5 // pred_region
        %s1115 = ssub.s32 %s19, 2
        // Predicated region
        $region65: #{tpu_custom_call.1} parent=63 // pred_check
          %p1116 = pneg %p158
        $region66: #{tpu_custom_call.1} parent=63 // pred_check_branch
          %1118 = sbr.rel (%p1116) target = $region68
        $region67: #{tpu_custom_call.1} parent=63 // pred_region
          %s1119 = sand.u32 %s143, 1
          %s1120 = scalar_lea.sflag [#allocation4], %s1119
          %s1121 = sand.u32 %s143, 1
          %s1122 = smul.addr %s1121, 64
          %s1123 = scalar_lea.vmem [#allocation10], %s1122
          %1125 = dma.done %s1120, 1024
        $region68: #{tpu_custom_call.1} parent=63 // pred_fallthru
          _
      $region64: #{tpu_custom_call.1} parent=5 // pred_fallthru
        _
    $region6: #{tpu_custom_call.1} parent=1 // loop_footer
      %s23 = sadd.s32 1, %s19
    $region7: #{tpu_custom_call.1} parent=1 // loop_footer_branch
      %18 = sbr.rel target = $region3
    $region8: #{tpu_custom_call.1} parent=1 // loop_exit
      _
    %1126 = vsyncpa [#allocation3], 1
    %s1127 = scalar_lea.sflag [#allocation3], 1
    %1128 = vsyncpa %s1127, 1
    %1129 = vsyncpa [#allocation6], 1
    %1130 = vsyncpa [#allocation9], 1
    %1131 = vsyncpa [#allocation4], 1
    %s1132 = scalar_lea.sflag [#allocation4], 1
    %1133 = vsyncpa %s1132, 1

</llo_original>
